<compile_context>
chip_gen: v5e
topology: v5e:2x2
jax: 0.10.0
libtpu: 0.0.40
codegen_flags: <defaults>
</compile_context>

<pallas_src>
import jax
import jax.numpy as jnp
from jax.experimental import pallas as pl
from jax.experimental.pallas import tpu as pltpu


def _round_up(a, m):
    return ((a + m - 1) // m) * m


def ae_kernel(x_ref,
              w1_ref, b1_ref,     # encoder layer 0: (D, H) bf16, (1, H) f32
              w2c_ref, b2c_ref,   # fused [W2@W3 | W2]: (H, H+E) bf16, (1, H+E) f32
              w4_ref, b4_ref,     # decoder layer 1: (H, D) bf16, (1, D) f32
              z_ref, xhat_ref):
    hid = w4_ref.shape[0]   # H (static)

    # ---- encoder layer 0 ----
    # x arrives at its native dtype; the bf16 cast rides an otherwise idle VPU
    # slot instead of being a separate XLA convert pass over HBM.
    x_bf = x_ref[...].astype(jnp.bfloat16)
    h1 = jnp.dot(x_bf, w1_ref[...],
                 preferred_element_type=jnp.float32) + b1_ref[...]
    h1 = jnp.maximum(h1, 0.0)                       # ReLU (f32 VPU, v5e-safe)

    # ---- fused encoder-out + decoder-in matmul (K = H, N = H + E) ----
    #   columns [0 : H)    -> pre-ReLU decoder hidden (= z @ W3 + b3)
    #   columns [H : H+E)  -> z                       (= h1 @ W2 + b2)
    # Both slices start on 128-lane boundaries since H = 128.
    hz = jnp.dot(h1.astype(jnp.bfloat16), w2c_ref[...],
                 preferred_element_type=jnp.float32) + b2c_ref[...]
    z_ref[...] = hz[:, hid:].astype(z_ref.dtype)
    h2 = jnp.maximum(hz[:, :hid], 0.0)              # ReLU (f32)

    # ---- decoder layer 1 (final_nonlinearity = identity) ----
    xhat = jnp.dot(h2.astype(jnp.bfloat16), w4_ref[...],
                   preferred_element_type=jnp.float32) + b4_ref[...]
    xhat_ref[...] = xhat.astype(xhat_ref.dtype)


def prepare_params(params):
    """Fuse encoder-out / decoder-in and cast weights to bf16 (biases f32).

    z      = h1 @ W2 + b2
    h2_pre = z  @ W3 + b3 = h1 @ (W2 @ W3) + (b2 @ W3 + b3)

    Fused columns are ordered [W2@W3 | W2] so both kernel-side column slices
    fall on 128-lane tile boundaries.  (Eval-mode only: fusion is invalid if
    dropout / any op runs between encoder output and decoder input.)
    """
    w1, b1 = params["w1"], params["b1"]
    w2, b2 = params["w2"], params["b2"]
    w3, b3 = params["w3"], params["b3"]
    w4, b4 = params["w4"], params["b4"]
    w23 = w2 @ w3
    b23 = b2 @ w3 + b3
    w2c = jnp.concatenate([w23, w2], axis=1)        # (H, H + E)
    b2c = jnp.concatenate([b23, b2], axis=1)        # (1, H + E)
    return dict(
        w1=w1.astype(jnp.bfloat16),   b1=b1.astype(jnp.float32),
        w2c=w2c.astype(jnp.bfloat16), b2c=b2c.astype(jnp.float32),
        w4=w4.astype(jnp.bfloat16),   b4=b4.astype(jnp.float32))


def autoencoder_forward(x, kparams, *, encoding_dim, block_batch=None,
                        out_dtype=jnp.bfloat16):
    """x: (B, D) float array.  Returns (z, x_hat) in `out_dtype` (bf16 by
    default to halve HBM write traffic; pass jnp.float32 if the consumer
    needs full-precision outputs)."""
    B, D = x.shape
    H = kparams["w1"].shape[1]
    E = encoding_dim
    assert kparams["w2c"].shape == (H, H + E)
    assert kparams["w4"].shape == (H, D)

    # Batch tile: aim for >= 2 grid steps so v7x's two TensorCores both get
    # work (batch axis is "parallel"), cap at the ~1024-row roofline knee
    # (per-step overhead amortized; per-tile working set a few MiB, far under
    # scoped VMEM on v5e/v6e/v7x).  Round to 16 for bf16 output packing.
    if block_batch is None:
        block_batch = max(16, min(1024, _round_up(pl.cdiv(B, 2), 16)))
    block_batch = _round_up(block_batch, 16)
    grid = (pl.cdiv(B, block_batch),)

    def batch_tiled(feat):
        return pl.BlockSpec((block_batch, feat), lambda i: (i, 0))

    def resident(shape):
        # Constant index map: block fetched once, stays resident across grid.
        return pl.BlockSpec(shape, lambda i: (0, 0))

    weight_elems = D * H + H * (H + E) + H * D
    out_bytes = jnp.dtype(out_dtype).itemsize
    flops = 2 * B * weight_elems
    bytes_accessed = (B * D * x.dtype.itemsize        # x read at native dtype
                      + weight_elems * 2              # bf16 weights
                      + (H + (H + E) + D) * 4         # f32 biases
                      + B * (E + D) * out_bytes)      # outputs

    z, x_hat = pl.pallas_call(
        ae_kernel,
        out_shape=(jax.ShapeDtypeStruct((B, E), out_dtype),
                   jax.ShapeDtypeStruct((B, D), out_dtype)),
        grid_spec=pltpu.PrefetchScalarGridSpec(
            num_scalar_prefetch=0,
            grid=grid,
            in_specs=[
                batch_tiled(D),                               # x
                resident((D, H)), resident((1, H)),           # w1, b1
                resident((H, H + E)), resident((1, H + E)),   # fused w2c, b2c
                resident((H, D)), resident((1, D)),           # w4, b4
            ],
            out_specs=[batch_tiled(E), batch_tiled(D)],       # z (full 64-wide dim), x_hat
        ),
        compiler_params=pltpu.CompilerParams(
            dimension_semantics=("parallel",)),
        cost_estimate=pl.CostEstimate(
            flops=int(flops), transcendentals=0,
            bytes_accessed=int(bytes_accessed)),
    )(x,
      kparams["w1"], kparams["b1"],
      kparams["w2c"], kparams["b2c"],
      kparams["w4"], kparams["b4"])
    return z, x_hat


def init_params(key, input_dim, hidden_dim, encoding_dim):
    """Deterministic init mimicking nn.Linear's U(-1/sqrt(fan_in), 1/sqrt(fan_in))."""
    def linear(k, fan_in, fan_out):
        kw, kb = jax.random.split(k)
        bound = 1.0 / jnp.sqrt(fan_in)
        w = jax.random.uniform(kw, (fan_in, fan_out), jnp.float32, -bound, bound)
        b = jax.random.uniform(kb, (1, fan_out), jnp.float32, -bound, bound)
        return w, b

    k1, k2, k3, k4 = jax.random.split(key, 4)
    w1, b1 = linear(k1, input_dim, hidden_dim)      # encoder layer 0
    w2, b2 = linear(k2, hidden_dim, encoding_dim)   # encoder layer 1
    w3, b3 = linear(k3, encoding_dim, hidden_dim)   # decoder layer 0
    w4, b4 = linear(k4, hidden_dim, input_dim)      # decoder layer 1
    return dict(w1=w1, b1=b1, w2=w2, b2=b2, w3=w3, b3=b3, w4=w4, b4=b4)


if __name__ == "__main__":
    INPUT_DIM = 256
    HIDDEN_DIM = 128
    ENCODING_DIM = 64
    BATCH = 16

    key = jax.random.PRNGKey(0)
    kx, kp = jax.random.split(key)
    x = jax.random.normal(kx, (BATCH, INPUT_DIM), jnp.float32)
    params = init_params(kp, INPUT_DIM, HIDDEN_DIM, ENCODING_DIM)
    kparams = prepare_params(params)

    z, x_hat = autoencoder_forward(x, kparams, encoding_dim=ENCODING_DIM)
    jax.block_until_ready((z, x_hat))

    # Pure-JAX f32 reference (exact module semantics, sequential, unfused).
    h1 = jnp.maximum(x @ params["w1"] + params["b1"], 0.0)
    z_ref = h1 @ params["w2"] + params["b2"]
    h2 = jnp.maximum(z_ref @ params["w3"] + params["b3"], 0.0)
    xhat_ref = h2 @ params["w4"] + params["b4"]

    assert z.shape == (BATCH, ENCODING_DIM) and x_hat.shape == (BATCH, INPUT_DIM)
    z32 = z.astype(jnp.float32)
    xhat32 = x_hat.astype(jnp.float32)
    # bf16 weights/activations/outputs (f32 accumulation) -> relaxed tolerance.
    assert jnp.allclose(z32, z_ref, atol=6e-2, rtol=6e-2), \
        float(jnp.max(jnp.abs(z32 - z_ref)))
    assert jnp.allclose(xhat32, xhat_ref, atol=6e-2, rtol=6e-2), \
        float(jnp.max(jnp.abs(xhat32 - xhat_ref)))

    print("KERNEL_OK")
</pallas_src>

<mosaic_0001>
module attributes {stable_mosaic.version = 11 : i64} {
  func.func @ae_kernel(%arg0: i32, %arg1: memref<16x256xf32, #tpu.memory_space<vmem>>, %arg2: memref<256x128xbf16, #tpu.memory_space<vmem>>, %arg3: memref<1x128xf32, #tpu.memory_space<vmem>>, %arg4: memref<128x192xbf16, #tpu.memory_space<vmem>>, %arg5: memref<1x192xf32, #tpu.memory_space<vmem>>, %arg6: memref<128x256xbf16, #tpu.memory_space<vmem>>, %arg7: memref<1x256xf32, #tpu.memory_space<vmem>>, %arg8: memref<16x64xbf16, #tpu.memory_space<vmem>>, %arg9: memref<16x256xbf16, #tpu.memory_space<vmem>>) attributes {dimension_semantics = [#tpu.dimension_semantics<parallel>], iteration_bounds = array<i64: 1>, scalar_prefetch = 0 : i64, scratch_operands = 0 : i64, tpu.core_type = #tpu.core_type<tc>, window_params = [{transform_indices = @transform_0, window_bounds = array<i64: 16, 256>}, {pipeline_mode = #tpu.pipeline_mode<synchronous>, transform_indices = @transform_1, window_bounds = array<i64: 256, 128>}, {pipeline_mode = #tpu.pipeline_mode<synchronous>, transform_indices = @transform_2, window_bounds = array<i64: 1, 128>}, {pipeline_mode = #tpu.pipeline_mode<synchronous>, transform_indices = @transform_3, window_bounds = array<i64: 128, 192>}, {pipeline_mode = #tpu.pipeline_mode<synchronous>, transform_indices = @transform_4, window_bounds = array<i64: 1, 192>}, {pipeline_mode = #tpu.pipeline_mode<synchronous>, transform_indices = @transform_5, window_bounds = array<i64: 128, 256>}, {pipeline_mode = #tpu.pipeline_mode<synchronous>, transform_indices = @transform_6, window_bounds = array<i64: 1, 256>}, {transform_indices = @transform_7, window_bounds = array<i64: 16, 64>}, {transform_indices = @transform_8, window_bounds = array<i64: 16, 256>}]} {
    %c0 = arith.constant 0 : index
    %c0_0 = arith.constant 0 : index
    %0 = vector.load %arg1[%c0, %c0_0] : memref<16x256xf32, #tpu.memory_space<vmem>>, vector<16x256xf32>
    %1 = arith.truncf %0 : vector<16x256xf32> to vector<16x256xbf16>
    %c0_1 = arith.constant 0 : index
    %c0_2 = arith.constant 0 : index
    %2 = vector.load %arg2[%c0_1, %c0_2] : memref<256x128xbf16, #tpu.memory_space<vmem>>, vector<256x128xbf16>
    %cst = arith.constant dense<0.000000e+00> : vector<16x128xf32>
    %3 = tpu.matmul %1, %2, %cst {dimension_numbers = #tpu.dot_dimension_numbers<[1], [0], [0], [1], [0, 0, 1, 1], [], []>} : vector<16x256xbf16>, vector<256x128xbf16>, vector<16x128xf32> -> vector<16x128xf32>
    %c0_3 = arith.constant 0 : index
    %c0_4 = arith.constant 0 : index
    %4 = vector.load %arg3[%c0_3, %c0_4] : memref<1x128xf32, #tpu.memory_space<vmem>>, vector<1x128xf32>
    %5 = vector.broadcast %4 : vector<1x128xf32> to vector<16x128xf32>
    %6 = arith.addf %3, %5 : vector<16x128xf32>
    %cst_5 = arith.constant 0.000000e+00 : f32
    %7 = vector.broadcast %cst_5 : f32 to vector<16x128xf32>
    %8 = arith.maximumf %6, %7 : vector<16x128xf32>
    %9 = arith.truncf %8 : vector<16x128xf32> to vector<16x128xbf16>
    %c0_6 = arith.constant 0 : index
    %c0_7 = arith.constant 0 : index
    %10 = vector.load %arg4[%c0_6, %c0_7] : memref<128x192xbf16, #tpu.memory_space<vmem>>, vector<128x192xbf16>
    %cst_8 = arith.constant dense<0.000000e+00> : vector<16x192xf32>
    %11 = tpu.matmul %9, %10, %cst_8 {dimension_numbers = #tpu.dot_dimension_numbers<[1], [0], [0], [1], [0, 0, 1, 1], [], []>} : vector<16x128xbf16>, vector<128x192xbf16>, vector<16x192xf32> -> vector<16x192xf32>
    %c0_9 = arith.constant 0 : index
    %c0_10 = arith.constant 0 : index
    %12 = vector.load %arg5[%c0_9, %c0_10] : memref<1x192xf32, #tpu.memory_space<vmem>>, vector<1x192xf32>
    %13 = vector.broadcast %12 : vector<1x192xf32> to vector<16x192xf32>
    %14 = arith.addf %11, %13 : vector<16x192xf32>
    %15 = vector.extract_strided_slice %14 {offsets = [0, 128], sizes = [16, 64], strides = [1, 1]} : vector<16x192xf32> to vector<16x64xf32>
    %16 = arith.truncf %15 : vector<16x64xf32> to vector<16x64xbf16>
    %c0_11 = arith.constant 0 : index
    %c0_12 = arith.constant 0 : index
    %17 = vector.load %arg8[%c0_11, %c0_12] : memref<16x64xbf16, #tpu.memory_space<vmem>>, vector<16x64xbf16>
    tpu.vector_store %arg8[%c0_11, %c0_12], %16 {strides = array<i32>} : memref<16x64xbf16, #tpu.memory_space<vmem>>, vector<16x64xbf16>,
    %18 = vector.extract_strided_slice %14 {offsets = [0, 0], sizes = [16, 128], strides = [1, 1]} : vector<16x192xf32> to vector<16x128xf32>
    %cst_13 = arith.constant 0.000000e+00 : f32
    %19 = vector.broadcast %cst_13 : f32 to vector<16x128xf32>
    %20 = arith.maximumf %18, %19 : vector<16x128xf32>
    %21 = arith.truncf %20 : vector<16x128xf32> to vector<16x128xbf16>
    %c0_14 = arith.constant 0 : index
    %c0_15 = arith.constant 0 : index
    %22 = vector.load %arg6[%c0_14, %c0_15] : memref<128x256xbf16, #tpu.memory_space<vmem>>, vector<128x256xbf16>
    %cst_16 = arith.constant dense<0.000000e+00> : vector<16x256xf32>
    %23 = tpu.matmul %21, %22, %cst_16 {dimension_numbers = #tpu.dot_dimension_numbers<[1], [0], [0], [1], [0, 0, 1, 1], [], []>} : vector<16x128xbf16>, vector<128x256xbf16>, vector<16x256xf32> -> vector<16x256xf32>
    %c0_17 = arith.constant 0 : index
    %c0_18 = arith.constant 0 : index
    %24 = vector.load %arg7[%c0_17, %c0_18] : memref<1x256xf32, #tpu.memory_space<vmem>>, vector<1x256xf32>
    %25 = vector.broadcast %24 : vector<1x256xf32> to vector<16x256xf32>
    %26 = arith.addf %23, %25 : vector<16x256xf32>
    %27 = arith.truncf %26 : vector<16x256xf32> to vector<16x256xbf16>
    %c0_19 = arith.constant 0 : index
    %c0_20 = arith.constant 0 : index
    %28 = vector.load %arg9[%c0_19, %c0_20] : memref<16x256xbf16, #tpu.memory_space<vmem>>, vector<16x256xbf16>
    tpu.vector_store %arg9[%c0_19, %c0_20], %27 {strides = array<i32>} : memref<16x256xbf16, #tpu.memory_space<vmem>>, vector<16x256xbf16>,
    return
  }
  func.func @transform_0(%arg0: i32) -> (i32, i32) {
    %c0_i32 = arith.constant 0 : i32
    %c0_i32_0 = arith.constant 0 : i32
    return %arg0, %c0_i32 : i32, i32
  }
  func.func @transform_1(%arg0: i32) -> (i32, i32) {
    %c0_i32 = arith.constant 0 : i32
    %c0_i32_0 = arith.constant 0 : i32
    %c0_i32_1 = arith.constant 0 : i32
    return %c0_i32, %c0_i32_0 : i32, i32
  }
  func.func @transform_2(%arg0: i32) -> (i32, i32) {
    %c0_i32 = arith.constant 0 : i32
    %c0_i32_0 = arith.constant 0 : i32
    %c0_i32_1 = arith.constant 0 : i32
    return %c0_i32, %c0_i32_0 : i32, i32
  }
  func.func @transform_3(%arg0: i32) -> (i32, i32) {
    %c0_i32 = arith.constant 0 : i32
    %c0_i32_0 = arith.constant 0 : i32
    %c0_i32_1 = arith.constant 0 : i32
    return %c0_i32, %c0_i32_0 : i32, i32
  }
  func.func @transform_4(%arg0: i32) -> (i32, i32) {
    %c0_i32 = arith.constant 0 : i32
    %c0_i32_0 = arith.constant 0 : i32
    %c0_i32_1 = arith.constant 0 : i32
    return %c0_i32, %c0_i32_0 : i32, i32
  }
  func.func @transform_5(%arg0: i32) -> (i32, i32) {
    %c0_i32 = arith.constant 0 : i32
    %c0_i32_0 = arith.constant 0 : i32
    %c0_i32_1 = arith.constant 0 : i32
    return %c0_i32, %c0_i32_0 : i32, i32
  }
  func.func @transform_6(%arg0: i32) -> (i32, i32) {
    %c0_i32 = arith.constant 0 : i32
    %c0_i32_0 = arith.constant 0 : i32
    %c0_i32_1 = arith.constant 0 : i32
    return %c0_i32, %c0_i32_0 : i32, i32
  }
  func.func @transform_7(%arg0: i32) -> (i32, i32) {
    %c0_i32 = arith.constant 0 : i32
    %c0_i32_0 = arith.constant 0 : i32
    return %arg0, %c0_i32 : i32, i32
  }
  func.func @transform_8(%arg0: i32) -> (i32, i32) {
    %c0_i32 = arith.constant 0 : i32
    %c0_i32_0 = arith.constant 0 : i32
    return %arg0, %c0_i32 : i32, i32
  }
}

</mosaic_0001>

<llo_original>
// kernel: tpu_custom_call.1
$region0: #{tpu_custom_call.1}
  #allocation0 [shape = 'u32[]', space=smem, size = 0x4, offset = 0x4, fixed_abs, tag = 'smem constant byte address 0x4 - core index']
  #allocation1 [shape = 'u32[72,128]{1,0:T(1,128)}', space=vmem, size = 0x9000, scoped, tag = 'internal scratch']
  %s0 = inlined_call_operand.vmem [shape: f32[16,256], index: 0, kind: input, shape index: {}]
  %s1 = inlined_call_operand.vmem [shape: bf16[256,128], index: 1, kind: input, shape index: {}]
  %s2 = inlined_call_operand.vmem [shape: f32[1,128], index: 2, kind: input, shape index: {}]
  %s3 = inlined_call_operand.vmem [shape: bf16[128,192], index: 3, kind: input, shape index: {}]
  %s4 = inlined_call_operand.vmem [shape: f32[1,192], index: 4, kind: input, shape index: {}]
  %s5 = inlined_call_operand.hbm [shape: bf16[128,256], index: 5, kind: input, shape index: {}]
  %s6 = inlined_call_operand.vmem [shape: f32[1,256], index: 6, kind: input, shape index: {}]
  %s7 = inlined_call_operand.hbm [shape: bf16[16,64], index: 7, kind: output, shape index: {0}]
  %s8 = inlined_call_operand.hbm [shape: bf16[16,256], index: 8, kind: output, shape index: {1}]
  %9 = xla_tuple %s7, %s8
  %s10 = sld [smem:[#allocation0]]
  $region50: #{tpu_custom_call.1} parent=0
    _
  %s12 = ssub.s32 1, %s10
  %s13 = scalar_select 0, %s12, %s10
  $region1: #{tpu_custom_call.1} parent=0
    #allocation2 [shape = 'u8[65536]{0}', space=vmem, size = 0x10000, scoped, tag = 'input window, operand 5, single buffered']
    #allocation3 [shape = 's32[1]{0}', space=sflag, size = 0x4, scoped, tag = 'scoped memory for tpu_custom_call.1']
    #allocation4 [shape = 's32[1]{0}', space=sflag, size = 0x4, scoped, tag = 'scoped memory for tpu_custom_call.1']
    #allocation5 [shape = 'u8[4096]{0}', space=vmem, size = 0x1000, scoped, tag = 'output window, operand 0, single buffered']
    #allocation6 [shape = 'u8[8192]{0}', space=vmem, size = 0x2000, scoped, tag = 'output window, operand 1, single buffered']
    #allocation7 [shape = 's32[1]{0}', space=sflag, size = 0x4, scoped, tag = 'scoped memory for tpu_custom_call.1']
    %14 = vsyncpa [#allocation3], 0
    %15 = vsyncpa [#allocation4], 0
    %16 = vsyncpa [#allocation7], 0
    // Predicated region
    $region2: #{tpu_custom_call.1} parent=1 // pred_check
      _
    $region3: #{tpu_custom_call.1} parent=1 // pred_check_branch
      %18 = sbr.rel (0) target = $region5
    $region4: #{tpu_custom_call.1} parent=1 // pred_region
      _
    $region5: #{tpu_custom_call.1} parent=1 // pred_fallthru
      _
    // Predicated region
    $region6: #{tpu_custom_call.1} parent=1 // pred_check
      _
    $region7: #{tpu_custom_call.1} parent=1 // pred_check_branch
      %20 = sbr.rel (0) target = $region9
    $region8: #{tpu_custom_call.1} parent=1 // pred_region
      _
    $region9: #{tpu_custom_call.1} parent=1 // pred_fallthru
      _
    // Predicated region
    $region10: #{tpu_custom_call.1} parent=1 // pred_check
      _
    $region11: #{tpu_custom_call.1} parent=1 // pred_check_branch
      %22 = sbr.rel (0) target = $region13
    $region12: #{tpu_custom_call.1} parent=1 // pred_region
      _
    $region13: #{tpu_custom_call.1} parent=1 // pred_fallthru
      _
    // Predicated region
    $region14: #{tpu_custom_call.1} parent=1 // pred_check
      _
    $region15: #{tpu_custom_call.1} parent=1 // pred_check_branch
      %24 = sbr.rel (0) target = $region17
    $region16: #{tpu_custom_call.1} parent=1 // pred_region
      _
    $region17: #{tpu_custom_call.1} parent=1 // pred_fallthru
      _
    // Predicated region
    $region18: #{tpu_custom_call.1} parent=1 // pred_check
      _
    $region19: #{tpu_custom_call.1} parent=1 // pred_check_branch
      %26 = sbr.rel (0) target = $region21
    $region20: #{tpu_custom_call.1} parent=1 // pred_region
      _
    $region21: #{tpu_custom_call.1} parent=1 // pred_fallthru
      _
    // Predicated region
    $region22: #{tpu_custom_call.1} parent=1 // pred_check
      _
    $region23: #{tpu_custom_call.1} parent=1 // pred_check_branch
      %28 = sbr.rel (0) target = $region25
    $region24: #{tpu_custom_call.1} parent=1 // pred_region
      %30 = vsyncadd [#allocation3], 0
      %s31 = sshll.u32 %s5, 4
      %s32 = int_to_ptr.hbm [resolvable:$true] %s31
      %s33 = sshll.u32 [#allocation2], 4
      %s34 = int_to_ptr.vmem [resolvable:$true] %s33
      %39 = dma.hbm_to_vmem [thread:$0]  %s32, 2048, %s34, [#allocation3], 128, 128, 8
    $region25: #{tpu_custom_call.1} parent=1 // pred_fallthru
      _
    // Predicated region
    $region26: #{tpu_custom_call.1} parent=1 // pred_check
      _
    $region27: #{tpu_custom_call.1} parent=1 // pred_check_branch
      %41 = sbr.rel (0) target = $region29
    $region28: #{tpu_custom_call.1} parent=1 // pred_region
      _
    $region29: #{tpu_custom_call.1} parent=1 // pred_fallthru
      _
    // Predicated region
    $region30: #{tpu_custom_call.1} parent=1 // pred_check
      _
    $region31: #{tpu_custom_call.1} parent=1 // pred_check_branch
      %43 = sbr.rel (0) target = $region33
    $region32: #{tpu_custom_call.1} parent=1 // pred_region
      %45 = dma.done [#allocation3], 2048
    $region33: #{tpu_custom_call.1} parent=1 // pred_fallthru
      _
    %v46 = vld [vmem:[%s0] sm:$0xff]
    %v47 = vld [vmem:[%s0 + $0x8] sm:$0xff]
    %v48 = vld [vmem:[%s0 + $0x10] sm:$0xff]
    %v49 = vld [vmem:[%s0 + $0x18] sm:$0xff]
    %v50 = vpack.c.bf16 %v48, %v46
    %v51 = vpack.c.bf16 %v49, %v47
    %v52 = vld [vmem:[%s1] sm:$0xf]
    %v53 = vld [vmem:[%s1 + $0x4] sm:$0xf]
    %v54 = vld [vmem:[%s1 + $0x8] sm:$0xf]
    %v55 = vld [vmem:[%s1 + $0xc] sm:$0xf]
    %v56 = vld [vmem:[%s1 + $0x10] sm:$0xf]
    %v57 = vld [vmem:[%s1 + $0x14] sm:$0xf]
    %v58 = vld [vmem:[%s1 + $0x18] sm:$0xf]
    %v59 = vld [vmem:[%s1 + $0x1c] sm:$0xf]
    %v60 = vld [vmem:[%s1 + $0x20] sm:$0xf]
    %v61 = vld [vmem:[%s1 + $0x24] sm:$0xf]
    %v62 = vld [vmem:[%s1 + $0x28] sm:$0xf]
    %v63 = vld [vmem:[%s1 + $0x2c] sm:$0xf]
    %v64 = vld [vmem:[%s1 + $0x30] sm:$0xf]
    %v65 = vld [vmem:[%s1 + $0x34] sm:$0xf]
    %v66 = vld [vmem:[%s1 + $0x38] sm:$0xf]
    %v67 = vld [vmem:[%s1 + $0x3c] sm:$0xf]
    %v68 = vld [vmem:[%s1 + $0x40] sm:$0xf]
    %v69 = vld [vmem:[%s1 + $0x44] sm:$0xf]
    %v70 = vld [vmem:[%s1 + $0x48] sm:$0xf]
    %v71 = vld [vmem:[%s1 + $0x4c] sm:$0xf]
    %v72 = vld [vmem:[%s1 + $0x50] sm:$0xf]
    %v73 = vld [vmem:[%s1 + $0x54] sm:$0xf]
    %v74 = vld [vmem:[%s1 + $0x58] sm:$0xf]
    %v75 = vld [vmem:[%s1 + $0x5c] sm:$0xf]
    %v76 = vld [vmem:[%s1 + $0x60] sm:$0xf]
    %v77 = vld [vmem:[%s1 + $0x64] sm:$0xf]
    %v78 = vld [vmem:[%s1 + $0x68] sm:$0xf]
    %v79 = vld [vmem:[%s1 + $0x6c] sm:$0xf]
    %v80 = vld [vmem:[%s1 + $0x70] sm:$0xf]
    %v81 = vld [vmem:[%s1 + $0x74] sm:$0xf]
    %v82 = vld [vmem:[%s1 + $0x78] sm:$0xf]
    %v83 = vld [vmem:[%s1 + $0x7c] sm:$0xf]
    %v84 = vld [vmem:[%s2] sm:$0x1]
    %v86 = vperm.slane %v84, 0
    %v120 = vunpack.c.l.b16 %v52
    %v121 = vunpack.c.l.b16 %v53
    %v122 = vunpack.c.l.b16 %v54
    %v123 = vunpack.c.l.b16 %v55
    %v124 = vunpack.c.l.b16 %v56
    %v125 = vunpack.c.l.b16 %v57
    %v126 = vunpack.c.l.b16 %v58
    %v127 = vunpack.c.l.b16 %v59
    %v128 = vunpack.c.l.b16 %v60
    %v129 = vunpack.c.l.b16 %v61
    %v130 = vunpack.c.l.b16 %v62
    %v131 = vunpack.c.l.b16 %v63
    %v132 = vunpack.c.l.b16 %v64
    %v133 = vunpack.c.l.b16 %v65
    %v134 = vunpack.c.l.b16 %v66
    %v135 = vunpack.c.l.b16 %v67
    %v136 = vunpack.c.l.b16 %v68
    %v137 = vunpack.c.l.b16 %v69
    %v138 = vunpack.c.l.b16 %v70
    %v139 = vunpack.c.l.b16 %v71
    %v140 = vunpack.c.l.b16 %v72
    %v141 = vunpack.c.l.b16 %v73
    %v142 = vunpack.c.l.b16 %v74
    %v143 = vunpack.c.l.b16 %v75
    %v144 = vunpack.c.l.b16 %v76
    %v145 = vunpack.c.l.b16 %v77
    %v146 = vunpack.c.l.b16 %v78
    %v147 = vunpack.c.l.b16 %v79
    %v148 = vunpack.c.l.b16 %v80
    %v149 = vunpack.c.l.b16 %v81
    %v150 = vunpack.c.l.b16 %v82
    %v151 = vunpack.c.l.b16 %v83
    %v152 = vpack.c.b16 %v121, %v120
    %v153 = vpack.c.b16 %v123, %v122
    %v154 = vpack.c.b16 %v125, %v124
    %v155 = vpack.c.b16 %v127, %v126
    %v156 = vpack.c.b16 %v129, %v128
    %v157 = vpack.c.b16 %v131, %v130
    %v158 = vpack.c.b16 %v133, %v132
    %v159 = vpack.c.b16 %v135, %v134
    %v160 = vpack.c.b16 %v137, %v136
    %v161 = vpack.c.b16 %v139, %v138
    %v162 = vpack.c.b16 %v141, %v140
    %v163 = vpack.c.b16 %v143, %v142
    %v164 = vpack.c.b16 %v145, %v144
    %v165 = vpack.c.b16 %v147, %v146
    %v166 = vpack.c.b16 %v149, %v148
    %v167 = vpack.c.b16 %v151, %v150
    %184 = vmatpush.bf16.msra.mxu0 %v159
    %185 = vmatpush.bf16.msra.mxu0 %v158
    %186 = vmatpush.bf16.msra.mxu0 %v157
    %187 = vmatpush.bf16.msra.mxu0 %v156
    %188 = vmatpush.bf16.msra.mxu0 %v155
    %189 = vmatpush.bf16.msra.mxu0 %v154
    %190 = vmatpush.bf16.msra.mxu0 %v153
    %191 = vmatpush.bf16.msra.mxu0 %v152
    %192 = vmatmul.bf16.gmra.mxu0 %v50
    %v193 = vpop.f32.mrf.mxu0
    %v194 = vadd.f32 %v86, %v193
    %v195 = vpop.f32.mrf.mxu0
    %v196 = vadd.f32 %v86, %v195
    %197 = vdwg.mxu0
    %198 = vmatpush.bf16.msra.mxu0 %v167
    %199 = vmatpush.bf16.msra.mxu0 %v166
    %200 = vmatpush.bf16.msra.mxu0 %v165
    %201 = vmatpush.bf16.msra.mxu0 %v164
    %202 = vmatpush.bf16.msra.mxu0 %v163
    %203 = vmatpush.bf16.msra.mxu0 %v162
    %204 = vmatpush.bf16.msra.mxu0 %v161
    %205 = vmatpush.bf16.msra.mxu0 %v160
    %206 = vmatmul.bf16.gmra.mxu0 %v51
    %v207 = vpop.f32.mrf.mxu0
    %v208 = vadd.f32 %v194, %v207
    %v209 = vpop.f32.mrf.mxu0
    %v210 = vadd.f32 %v196, %v209
    %211 = vdwg.mxu0
    %v212 = vmax.f32 %v208, 0.0
    %v213 = vmax.f32 %v210, 0.0
    %v214 = vpack.c.bf16 %v213, %v212
    %v215 = vld [vmem:[%s3] sm:$0xff]
    %v216 = vld [vmem:[%s3 + $0x8] sm:$0xff]
    %v217 = vld [vmem:[%s3 + $0x10] sm:$0xff]
    %v218 = vld [vmem:[%s3 + $0x18] sm:$0xff]
    %v219 = vld [vmem:[%s3 + $0x20] sm:$0xff]
    %v220 = vld [vmem:[%s3 + $0x28] sm:$0xff]
    %v221 = vld [vmem:[%s3 + $0x30] sm:$0xff]
    %v222 = vld [vmem:[%s3 + $0x38] sm:$0xff]
    %v223 = vld [vmem:[%s3 + $0x40] sm:$0xff]
    %v224 = vld [vmem:[%s3 + $0x48] sm:$0xff]
    %v225 = vld [vmem:[%s3 + $0x50] sm:$0xff]
    %v226 = vld [vmem:[%s3 + $0x58] sm:$0xff]
    %v227 = vld [vmem:[%s3 + $0x60] sm:$0xff]
    %v228 = vld [vmem:[%s3 + $0x68] sm:$0xff]
    %v229 = vld [vmem:[%s3 + $0x70] sm:$0xff]
    %v230 = vld [vmem:[%s3 + $0x78] sm:$0xff]
    %v231 = vld [vmem:[%s4] sm:$0x3]
    %v233 = vperm.slane %v231, 0
    %v234 = vperm.slane %v231, 1
    %v253 = vunpack.c.l.b16 %v215
    %v254 = vunpack.c.h.b16 %v215
    %v255 = vunpack.c.l.b16 %v216
    %v256 = vunpack.c.h.b16 %v216
    %v257 = vunpack.c.l.b16 %v217
    %v258 = vunpack.c.h.b16 %v217
    %v259 = vunpack.c.l.b16 %v218
    %v260 = vunpack.c.h.b16 %v218
    %v261 = vunpack.c.l.b16 %v219
    %v262 = vunpack.c.h.b16 %v219
    %v263 = vunpack.c.l.b16 %v220
    %v264 = vunpack.c.h.b16 %v220
    %v265 = vunpack.c.l.b16 %v221
    %v266 = vunpack.c.h.b16 %v221
    %v267 = vunpack.c.l.b16 %v222
    %v268 = vunpack.c.h.b16 %v222
    %v269 = vunpack.c.l.b16 %v223
    %v270 = vunpack.c.h.b16 %v223
    %v271 = vunpack.c.l.b16 %v224
    %v272 = vunpack.c.h.b16 %v224
    %v273 = vunpack.c.l.b16 %v225
    %v274 = vunpack.c.h.b16 %v225
    %v275 = vunpack.c.l.b16 %v226
    %v276 = vunpack.c.h.b16 %v226
    %v277 = vunpack.c.l.b16 %v227
    %v278 = vunpack.c.h.b16 %v227
    %v279 = vunpack.c.l.b16 %v228
    %v280 = vunpack.c.h.b16 %v228
    %v281 = vunpack.c.l.b16 %v229
    %v282 = vunpack.c.h.b16 %v229
    %v283 = vunpack.c.l.b16 %v230
    %v284 = vunpack.c.h.b16 %v230
    %v285 = vpack.c.b16 %v255, %v253
    %v286 = vpack.c.b16 %v256, %v254
    %v287 = vpack.c.b16 %v259, %v257
    %v288 = vpack.c.b16 %v260, %v258
    %v289 = vpack.c.b16 %v263, %v261
    %v290 = vpack.c.b16 %v264, %v262
    %v291 = vpack.c.b16 %v267, %v265
    %v292 = vpack.c.b16 %v268, %v266
    %v293 = vpack.c.b16 %v271, %v269
    %v294 = vpack.c.b16 %v272, %v270
    %v295 = vpack.c.b16 %v275, %v273
    %v296 = vpack.c.b16 %v276, %v274
    %v297 = vpack.c.b16 %v279, %v277
    %v298 = vpack.c.b16 %v280, %v278
    %v299 = vpack.c.b16 %v283, %v281
    %v300 = vpack.c.b16 %v284, %v282
    %317 = vmatpush.bf16.msra.mxu0 %v299
    %318 = vmatpush.bf16.msra.mxu0 %v297
    %319 = vmatpush.bf16.msra.mxu0 %v295
    %320 = vmatpush.bf16.msra.mxu0 %v293
    %321 = vmatpush.bf16.msra.mxu0 %v291
    %322 = vmatpush.bf16.msra.mxu0 %v289
    %323 = vmatpush.bf16.msra.mxu0 %v287
    %324 = vmatpush.bf16.msra.mxu0 %v285
    %325 = vmatmul.bf16.gmra.mxu0 %v214
    %v326 = vpop.f32.mrf.mxu0
    %v327 = vadd.f32 %v233, %v326
    %v328 = vpop.f32.mrf.mxu0
    %v329 = vadd.f32 %v233, %v328
    %330 = vdwg.mxu0
    %331 = vmatpush.bf16.msra.mxu0 %v300
    %332 = vmatpush.bf16.msra.mxu0 %v298
    %333 = vmatpush.bf16.msra.mxu0 %v296
    %334 = vmatpush.bf16.msra.mxu0 %v294
    %335 = vmatpush.bf16.msra.mxu0 %v292
    %336 = vmatpush.bf16.msra.mxu0 %v290
    %337 = vmatpush.bf16.msra.mxu0 %v288
    %338 = vmatpush.bf16.msra.mxu0 %v286
    %339 = vmatmul.bf16.gmra.mxu0 %v214
    %v340 = vpop.f32.mrf.mxu0
    %v341 = vadd.f32 %v234, %v340
    %v342 = vpop.f32.mrf.mxu0
    %v343 = vadd.f32 %v234, %v342
    %344 = vdwg.mxu0
    %v345 = vpack.c.bf16 %v341, %v341
    %v346 = vpack.c.bf16 %v343, %v343
    %vm347 = vcmask 519168
    %348 = vst.msk [vmem:[#allocation5] sm:$0xf] %vm347, %v345
    %349 = vst.msk [vmem:[#allocation5 + $0x4] sm:$0xf] %vm347, %v346
    %v350 = vmax.f32 %v327, 0.0
    %v351 = vmax.f32 %v329, 0.0
    %v352 = vpack.c.bf16 %v351, %v350
    %v353 = vld [vmem:[#allocation2] sm:$0xff]
    %v354 = vld [vmem:[#allocation2 + $0x8] sm:$0xff]
    %v355 = vld [vmem:[#allocation2 + $0x10] sm:$0xff]
    %v356 = vld [vmem:[#allocation2 + $0x18] sm:$0xff]
    %v357 = vld [vmem:[#allocation2 + $0x20] sm:$0xff]
    %v358 = vld [vmem:[#allocation2 + $0x28] sm:$0xff]
    %v359 = vld [vmem:[#allocation2 + $0x30] sm:$0xff]
    %v360 = vld [vmem:[#allocation2 + $0x38] sm:$0xff]
    %v361 = vld [vmem:[#allocation2 + $0x40] sm:$0xff]
    %v362 = vld [vmem:[#allocation2 + $0x48] sm:$0xff]
    %v363 = vld [vmem:[#allocation2 + $0x50] sm:$0xff]
    %v364 = vld [vmem:[#allocation2 + $0x58] sm:$0xff]
    %v365 = vld [vmem:[#allocation2 + $0x60] sm:$0xff]
    %v366 = vld [vmem:[#allocation2 + $0x68] sm:$0xff]
    %v367 = vld [vmem:[#allocation2 + $0x70] sm:$0xff]
    %v368 = vld [vmem:[#allocation2 + $0x78] sm:$0xff]
    %v369 = vld [vmem:[%s6] sm:$0x3]
    %v371 = vperm.slane %v369, 0
    %v372 = vperm.slane %v369, 1
    %v391 = vunpack.c.l.b16 %v353
    %v392 = vunpack.c.h.b16 %v353
    %v393 = vunpack.c.l.b16 %v354
    %v394 = vunpack.c.h.b16 %v354
    %v395 = vunpack.c.l.b16 %v355
    %v396 = vunpack.c.h.b16 %v355
    %v397 = vunpack.c.l.b16 %v356
    %v398 = vunpack.c.h.b16 %v356
    %v399 = vunpack.c.l.b16 %v357
    %v400 = vunpack.c.h.b16 %v357
    %v401 = vunpack.c.l.b16 %v358
    %v402 = vunpack.c.h.b16 %v358
    %v403 = vunpack.c.l.b16 %v359
    %v404 = vunpack.c.h.b16 %v359
    %v405 = vunpack.c.l.b16 %v360
    %v406 = vunpack.c.h.b16 %v360
    %v407 = vunpack.c.l.b16 %v361
    %v408 = vunpack.c.h.b16 %v361
    %v409 = vunpack.c.l.b16 %v362
    %v410 = vunpack.c.h.b16 %v362
    %v411 = vunpack.c.l.b16 %v363
    %v412 = vunpack.c.h.b16 %v363
    %v413 = vunpack.c.l.b16 %v364
    %v414 = vunpack.c.h.b16 %v364
    %v415 = vunpack.c.l.b16 %v365
    %v416 = vunpack.c.h.b16 %v365
    %v417 = vunpack.c.l.b16 %v366
    %v418 = vunpack.c.h.b16 %v366
    %v419 = vunpack.c.l.b16 %v367
    %v420 = vunpack.c.h.b16 %v367
    %v421 = vunpack.c.l.b16 %v368
    %v422 = vunpack.c.h.b16 %v368
    %v423 = vpack.c.b16 %v393, %v391
    %v424 = vpack.c.b16 %v394, %v392
    %v425 = vpack.c.b16 %v397, %v395
    %v426 = vpack.c.b16 %v398, %v396
    %v427 = vpack.c.b16 %v401, %v399
    %v428 = vpack.c.b16 %v402, %v400
    %v429 = vpack.c.b16 %v405, %v403
    %v430 = vpack.c.b16 %v406, %v404
    %v431 = vpack.c.b16 %v409, %v407
    %v432 = vpack.c.b16 %v410, %v408
    %v433 = vpack.c.b16 %v413, %v411
    %v434 = vpack.c.b16 %v414, %v412
    %v435 = vpack.c.b16 %v417, %v415
    %v436 = vpack.c.b16 %v418, %v416
    %v437 = vpack.c.b16 %v421, %v419
    %v438 = vpack.c.b16 %v422, %v420
    %455 = vmatpush.bf16.msra.mxu0 %v437
    %456 = vmatpush.bf16.msra.mxu0 %v435
    %457 = vmatpush.bf16.msra.mxu0 %v433
    %458 = vmatpush.bf16.msra.mxu0 %v431
    %459 = vmatpush.bf16.msra.mxu0 %v429
    %460 = vmatpush.bf16.msra.mxu0 %v427
    %461 = vmatpush.bf16.msra.mxu0 %v425
    %462 = vmatpush.bf16.msra.mxu0 %v423
    %463 = vmatmul.bf16.gmra.mxu0 %v352
    %v464 = vpop.f32.mrf.mxu0
    %v465 = vadd.f32 %v371, %v464
    %v466 = vpop.f32.mrf.mxu0
    %v467 = vadd.f32 %v371, %v466
    %468 = vdwg.mxu0
    %469 = vmatpush.bf16.msra.mxu0 %v438
    %470 = vmatpush.bf16.msra.mxu0 %v436
    %471 = vmatpush.bf16.msra.mxu0 %v434
    %472 = vmatpush.bf16.msra.mxu0 %v432
    %473 = vmatpush.bf16.msra.mxu0 %v430
    %474 = vmatpush.bf16.msra.mxu0 %v428
    %475 = vmatpush.bf16.msra.mxu0 %v426
    %476 = vmatpush.bf16.msra.mxu0 %v424
    %477 = vmatmul.bf16.gmra.mxu0 %v352
    %v478 = vpop.f32.mrf.mxu0
    %v479 = vadd.f32 %v372, %v478
    %v480 = vpop.f32.mrf.mxu0
    %v481 = vadd.f32 %v372, %v480
    %482 = vdwg.mxu0
    %v483 = vpack.c.bf16 %v479, %v465
    %v484 = vpack.c.bf16 %v481, %v467
    %485 = vst [vmem:[#allocation6] sm:$0xff] %v483
    %486 = vst [vmem:[#allocation6 + $0x8] sm:$0xff] %v484
    // Predicated region
    $region34: #{tpu_custom_call.1} parent=1 // pred_check
      _
    $region35: #{tpu_custom_call.1} parent=1 // pred_check_branch
      %488 = sbr.rel (0) target = $region37
    $region36: #{tpu_custom_call.1} parent=1 // pred_region
      %490 = vsyncadd [#allocation4], 0
      %s491 = sshll.u32 [#allocation5], 4
      %s492 = int_to_ptr.vmem [resolvable:$true] %s491
      %s493 = sshll.u32 %s7, 4
      %s494 = int_to_ptr.hbm [resolvable:$true] %s493
      %499 = dma.vmem_to_hbm [thread:$0]  %s492, 128, %s494, [#allocation4], 64, 64, 4
    $region37: #{tpu_custom_call.1} parent=1 // pred_fallthru
      _
    // Predicated region
    $region38: #{tpu_custom_call.1} parent=1 // pred_check
      _
    $region39: #{tpu_custom_call.1} parent=1 // pred_check_branch
      %501 = sbr.rel (0) target = $region41
    $region40: #{tpu_custom_call.1} parent=1 // pred_region
      %503 = vsyncadd [#allocation7], 0
      %s504 = sshll.u32 [#allocation6], 4
      %s505 = int_to_ptr.vmem [resolvable:$true] %s504
      %s506 = sshll.u32 %s8, 4
      %s507 = int_to_ptr.hbm [resolvable:$true] %s506
      %512 = dma.vmem_to_hbm [thread:$0]  %s505, 256, %s507, [#allocation7], 128, 128, 8
    $region41: #{tpu_custom_call.1} parent=1 // pred_fallthru
      _
    // Predicated region
    $region42: #{tpu_custom_call.1} parent=1 // pred_check
      _
    $region43: #{tpu_custom_call.1} parent=1 // pred_check_branch
      %514 = sbr.rel (0) target = $region45
    $region44: #{tpu_custom_call.1} parent=1 // pred_region
      %516 = dma.done [#allocation4], 128
    $region45: #{tpu_custom_call.1} parent=1 // pred_fallthru
      _
    // Predicated region
    $region46: #{tpu_custom_call.1} parent=1 // pred_check
      _
    $region47: #{tpu_custom_call.1} parent=1 // pred_check_branch
      %518 = sbr.rel (0) target = $region49
    $region48: #{tpu_custom_call.1} parent=1 // pred_region
      %520 = dma.done [#allocation7], 256
    $region49: #{tpu_custom_call.1} parent=1 // pred_fallthru
      _
    %521 = vsyncpa [#allocation3], 1
    %522 = vsyncpa [#allocation4], 1
    %523 = vsyncpa [#allocation7], 1

</llo_original>
